<compile_context>
chip_gen: v5e
topology: v5e:2x2
jax: 0.10.0
libtpu: 0.0.40
codegen_flags: <defaults>
</compile_context>

<pallas_src>
import functools
import math

import jax
import jax.numpy as jnp
from jax.experimental import pallas as pl
from jax.experimental.pallas import tpu as pltpu

LRELU_SLOPE = 0.2
BN_EPS = 1e-5
VMEM_LIMIT = 32 * 1024 * 1024


# ------------------------------- Pallas kernels ------------------------------

def _mm_bias_lrelu_kernel(a_ref, w_ref, b_ref, o_ref):
    # a: (tm, K) bf16   w: (K, tn) bf16   b: (1, tn) f32   o: (tm, tn) bf16
    y = jnp.dot(a_ref[...], w_ref[...],
                preferred_element_type=jnp.float32) + b_ref[...]
    o_ref[...] = jnp.where(y >= 0, y, LRELU_SLOPE * y).astype(o_ref.dtype)


@functools.lru_cache(maxsize=None)
def _make_chain_kernel(n_layers):
    """Sequential matmul+bias+LeakyReLU chain fused into one kernel
    (intermediates never leave VMEM)."""
    def kernel(*refs):
        x = refs[0][...]
        for i in range(n_layers):
            w = refs[1 + 2 * i][...]
            b = refs[2 + 2 * i][...]
            y = jnp.dot(x, w, preferred_element_type=jnp.float32) + b
            x = jnp.where(y >= 0, y, LRELU_SLOPE * y).astype(jnp.bfloat16)
        refs[-1][...] = x
    return kernel


def _logsoftmax_store(logits, o_ref):
    m = jnp.max(logits, axis=1, keepdims=True)
    z = logits - m
    lse = jnp.log(jnp.sum(jnp.exp(z), axis=1, keepdims=True))
    o_ref[...] = z - lse                                   # LogSoftmax(dim=1)


def _head_fused_kernel(x_ref, wc_ref, bc_ref, wf_ref, bf_ref, o_ref):
    # out_conv (1x1, BN folded) + LeakyReLU; AdaptiveAvgPool(1) is the identity
    # at 1x1 spatial; then Linear + LogSoftmax.  All f32 epilogue math.
    y = jnp.dot(x_ref[...], wc_ref[...],
                preferred_element_type=jnp.float32) + bc_ref[...]
    y = jnp.where(y >= 0, y, LRELU_SLOPE * y)
    logits = jnp.dot(y.astype(jnp.bfloat16), wf_ref[...],
                     preferred_element_type=jnp.float32) + bf_ref[...]
    _logsoftmax_store(logits, o_ref)


def _fc_logsoftmax_kernel(x_ref, wf_ref, bf_ref, o_ref):
    logits = jnp.dot(x_ref[...], wf_ref[...],
                     preferred_element_type=jnp.float32) + bf_ref[...]
    _logsoftmax_store(logits, o_ref)


# ------------------------------- tiling helpers --------------------------------

def _round_up(x, m):
    return ((x + m - 1) // m) * m


def _full_spec(shape):
    n = len(shape)
    return pl.BlockSpec(shape, lambda i, _n=n: (0,) * _n)


def _pick_cout_tile(cout):
    """Largest lane-dense (multiple of 128) tile that divides Cout into <=4
    pieces; otherwise one full-width tile (full-dim blocks are always legal)."""
    if cout % 128 == 0 and cout >= 256:
        t = (cout // 2) // 128 * 128
        while t >= 128:
            if cout % t == 0 and cout // t <= 4:
                return t
            t -= 128
    return cout


def _pick_m_tile(m):
    """Split M in two (16-aligned halves) so v7x gets a 2-step parallel axis
    when Cout could not be split; otherwise keep the full dim."""
    if m % 32 == 0:
        return m // 2
    return m


# --------------------------- fused matmul wrappers -----------------------------

def matmul_bias_lrelu(a, w, b):
    """(M,K) @ (K,Cout) + bias, LeakyReLU(0.2).  One-shot (full-K) kernel,
    optionally tiled over Cout (or M) for megacore.  Returns (M, Cout) bf16."""
    M, K = a.shape
    Cout = w.shape[1]
    a = a.astype(jnp.bfloat16)
    w = w.astype(jnp.bfloat16)
    b = b.astype(jnp.float32)

    tn = _pick_cout_tile(Cout)
    tm = M if Cout // tn >= 2 else _pick_m_tile(M)
    grid = (M // tm, Cout // tn)

    return pl.pallas_call(
        _mm_bias_lrelu_kernel,
        grid=grid,
        in_specs=[pl.BlockSpec((tm, K), lambda i, j: (i, 0)),
                  pl.BlockSpec((K, tn), lambda i, j: (0, j)),
                  pl.BlockSpec((1, tn), lambda i, j: (0, j))],
        out_specs=pl.BlockSpec((tm, tn), lambda i, j: (i, j)),
        out_shape=jax.ShapeDtypeStruct((M, Cout), jnp.bfloat16),
        compiler_params=pltpu.CompilerParams(
            dimension_semantics=("parallel", "parallel"),
            vmem_limit_bytes=VMEM_LIMIT),
        cost_estimate=pl.CostEstimate(
            flops=2 * M * K * Cout,
            transcendentals=0,
            bytes_accessed=(M * K * 2) * (M // tm)
            + (K * Cout * 2) * (M // tm) + M * Cout * 2),
    )(a, w, b)


def chain_matmul_bias_lrelu(a, layers):
    """layers: list of (w (Ki,Ci), bias (1,Ci)).  Sequential Conv1x1+BN+LReLU
    chain fused into ONE pallas_call (tiny M; weights live in VMEM)."""
    M, K0 = a.shape
    a = a.astype(jnp.bfloat16)
    cout = layers[-1][0].shape[1]
    args, in_specs = [a], [_full_spec(a.shape)]
    flops, wbytes = 0, 0
    for w, b in layers:
        w = w.astype(jnp.bfloat16)
        b = b.astype(jnp.float32)
        args += [w, b]
        in_specs += [_full_spec(w.shape), _full_spec(b.shape)]
        flops += 2 * M * w.shape[0] * w.shape[1]
        wbytes += w.size * 2 + b.size * 4
    return pl.pallas_call(
        _make_chain_kernel(len(layers)),
        grid=(1,),
        in_specs=in_specs,
        out_specs=_full_spec((M, cout)),
        out_shape=jax.ShapeDtypeStruct((M, cout), jnp.bfloat16),
        compiler_params=pltpu.CompilerParams(
            dimension_semantics=("arbitrary",),
            vmem_limit_bytes=VMEM_LIMIT),
        cost_estimate=pl.CostEstimate(
            flops=flops, transcendentals=0,
            bytes_accessed=M * K0 * 2 + wbytes + M * cout * 2),
    )(*args)


def fused_matmul_split(a, ws, bs):
    """One wide lane-dense matmul for several branches sharing the same input;
    returns the per-branch 2-D outputs."""
    ws = [w.astype(jnp.bfloat16) for w in ws]
    bs = [b.astype(jnp.float32) for b in bs]
    sizes = [w.shape[1] for w in ws]
    out = matmul_bias_lrelu(a, jnp.concatenate(ws, axis=1),
                            jnp.concatenate(bs, axis=1))
    offs, acc = [], 0
    for s in sizes[:-1]:
        acc += s
        offs.append(acc)
    return jnp.split(out, offs, axis=1)


# ------------------------------- layer wrappers -------------------------------

def _pair(v):
    return (v, v) if isinstance(v, int) else tuple(v)


def _effective_1x1(p, H, W):
    """If the conv collapses to a per-pixel matmul (true 1x1, or any kernel at
    1x1 spatial where only the centre tap reads real data), return
    (w2d (Cin,Cout), bias); else None."""
    w = p["w"]
    KH, KW, Cin, Cout = w.shape
    sh, sw = p["stride"]
    ph, pw = p["padding"]
    if (KH, KW, sh, sw, ph, pw) == (1, 1, 1, 1, 0, 0):
        return w.reshape(Cin, Cout), p["bias"]
    Hout = (H + 2 * ph - KH) // sh + 1
    Wout = (W + 2 * pw - KW) // sw + 1
    if H == W == Hout == Wout == 1 and ph < KH and pw < KW:
        return w[ph, pw], p["bias"]
    return None


def _valid_tap_range(K, pad, stride, n_in, n_out):
    """Contiguous range of kernel taps that read at least one non-padding
    element for some output position (the rest only multiply zeros)."""
    lo, hi = None, None
    for i in range(K):
        if any(pad <= i + stride * o < pad + n_in for o in range(n_out)):
            if lo is None:
                lo = i
            hi = i + 1
    if lo is None:                       # defensive; cannot happen here
        return 0, K
    return lo, hi


def conv_bn_lrelu(x, p):
    """x: (N,H,W,Cin) NHWC bf16.  p['w']: (KH,KW,Cin,Cout), BN scale folded."""
    N, H, W, _ = x.shape
    eff = _effective_1x1(p, H, W)
    if eff is not None:                  # 1x1 (or degenerate) conv: no im2col
        w2, b2 = eff
        out = matmul_bias_lrelu(x.reshape(N * H * W, -1), w2, b2)
        return out.reshape(N, H, W, out.shape[-1])

    w = p["w"]
    KH, KW, Cin, Cout = w.shape
    sh, sw = p["stride"]
    ph, pw = p["padding"]
    Hout = (H + 2 * ph - KH) // sh + 1
    Wout = (W + 2 * pw - KW) // sw + 1
    # drop taps that only ever read zero padding (big weight-traffic saving at
    # small spatial extents)
    ti0, ti1 = _valid_tap_range(KH, ph, sh, H, Hout)
    tj0, tj1 = _valid_tap_range(KW, pw, sw, W, Wout)
    # TODO(synk): build the im2col patches inside the kernel (tap grid axis /
    # shifted VMEM views) instead of materializing them in HBM.
    xp = jnp.pad(x, ((0, 0), (ph, ph), (pw, pw), (0, 0)))
    pats = [xp[:, i:i + sh * Hout:sh, j:j + sw * Wout:sw, :]
            for i in range(ti0, ti1) for j in range(tj0, tj1)]
    n_taps = (ti1 - ti0) * (tj1 - tj0)
    a = (pats[0] if n_taps == 1 else jnp.concatenate(pats, axis=-1)
         ).reshape(N * Hout * Wout, n_taps * Cin)
    w_sel = w[ti0:ti1, tj0:tj1].reshape(n_taps * Cin, Cout)
    out = matmul_bias_lrelu(a, w_sel, p["bias"])
    return out.reshape(N, Hout, Wout, Cout)


def conv1x1_fused_lrelu(x, plist):
    """Fuse several 1x1 Conv2d_BN branches sharing the same input into ONE
    lane-dense matmul; returns the list of per-branch NHWC outputs."""
    N, H, W, Cin = x.shape
    a = x.reshape(N * H * W, Cin)
    effs = [_effective_1x1(p, H, W) for p in plist]
    outs = fused_matmul_split(a, [e[0] for e in effs], [e[1] for e in effs])
    return [o.reshape(N, H, W, o.shape[-1]) for o in outs]


def pool2d(x, mode, stride):
    """3x3 pool, padding=1, as a pairwise XLA reduction over 9 shifted views
    (no 9x stacked tensor, no extra kernel launch)."""
    N, H, W, C = x.shape
    k, p, s = 3, 1, stride
    Hout = (H + 2 * p - k) // s + 1
    Wout = (W + 2 * p - k) // s + 1
    if mode == "max":
        xp = jnp.pad(x, ((0, 0), (p, p), (p, p), (0, 0)),
                     constant_values=-jnp.inf)
        acc = None
        for i in range(k):
            for j in range(k):
                v = xp[:, i:i + s * Hout:s, j:j + s * Wout:s, :]
                acc = v if acc is None else jnp.maximum(acc, v)
        return acc
    # avg pool, count_include_pad=True  -> divide by 9 always; sum in f32.
    xp = jnp.pad(x, ((0, 0), (p, p), (p, p), (0, 0)))
    acc = None
    for i in range(k):
        for j in range(k):
            v = xp[:, i:i + s * Hout:s, j:j + s * Wout:s, :].astype(jnp.float32)
            acc = v if acc is None else acc + v
    return (acc * (1.0 / 9.0)).astype(x.dtype)


def head_logsoftmax(x, out_conv_p, fc_w, fc_b, num_classes):
    """out_block Conv2d_BN(2048->1024) + AdaptiveAvgPool2d(1) + Linear +
    LogSoftmax.  At 1x1 spatial (this input size) the whole head is ONE
    fused pallas_call; larger spatial falls back to conv + XLA mean + FC."""
    N, H, W, Cin = x.shape
    HW = H * W
    NCp = fc_w.shape[1]
    if HW == 1:
        wc, bc = _effective_1x1(out_conv_p, H, W)
        args = (x.reshape(N, Cin).astype(jnp.bfloat16), wc, bc, fc_w, fc_b)
        kernel = _head_fused_kernel
        flops = 2 * N * Cin * wc.shape[1] + 2 * N * wc.shape[1] * NCp
    else:
        y = conv_bn_lrelu(x, out_conv_p)
        feat = jnp.mean(y.astype(jnp.float32), axis=(1, 2)).astype(jnp.bfloat16)
        args = (feat, fc_w, fc_b)
        kernel = _fc_logsoftmax_kernel
        flops = 2 * N * feat.shape[1] * NCp
    out = pl.pallas_call(
        kernel,
        grid=(1,),
        in_specs=[_full_spec(a.shape) for a in args],
        out_specs=_full_spec((N, NCp)),
        out_shape=jax.ShapeDtypeStruct((N, NCp), jnp.float32),
        compiler_params=pltpu.CompilerParams(
            dimension_semantics=("arbitrary",),
            vmem_limit_bytes=VMEM_LIMIT),
        cost_estimate=pl.CostEstimate(
            flops=flops, transcendentals=N * NCp,
            bytes_accessed=sum(int(a.size) * a.dtype.itemsize for a in args)
            + N * NCp * 4),
    )(*args)
    return out[:, :num_classes]


# ------------------------------ parameter builders ----------------------------

class ParamGen:
    def __init__(self, seed):
        self._key = jax.random.PRNGKey(seed)
        self._i = 0

    def key(self):
        self._i += 1
        return jax.random.fold_in(self._key, self._i)


def make_conv_bn(pg, cin, cout, ksize, padding, stride=1):
    kh, kw = _pair(ksize)
    ph, pw = _pair(padding)
    sh, sw = _pair(stride)
    k1, k2, k3, k4, k5 = jax.random.split(pg.key(), 5)
    fan_in = cin * kh * kw
    w = jax.random.normal(k1, (cout, cin, kh, kw), jnp.float32) / math.sqrt(fan_in)
    gamma = 1.0 + 0.1 * jax.random.normal(k2, (cout,), jnp.float32)
    beta = 0.1 * jax.random.normal(k3, (cout,), jnp.float32)
    running_mean = 0.1 * jax.random.normal(k4, (cout,), jnp.float32)
    running_var = 1.0 + 0.1 * jnp.abs(jax.random.normal(k5, (cout,), jnp.float32))
    # eval-mode BatchNorm folded into the weights + a bias
    scale = gamma / jnp.sqrt(running_var + BN_EPS)
    bias = beta - running_mean * scale
    w = w * scale[:, None, None, None]
    return {
        "w": jnp.transpose(w, (2, 3, 1, 0)).astype(jnp.bfloat16),  # (KH,KW,Cin,Cout)
        "bias": bias.reshape(1, cout).astype(jnp.float32),
        "stride": (sh, sw),
        "padding": (ph, pw),
    }


def make_inception_a(pg, cin, pool_ch):
    return {
        "b1": make_conv_bn(pg, cin, 64, 1, 0),
        "b5": [make_conv_bn(pg, cin, 48, 1, 0), make_conv_bn(pg, 48, 64, 5, 2)],
        "b3d": [make_conv_bn(pg, cin, 64, 1, 0),
                make_conv_bn(pg, 64, 96, 3, 1),
                make_conv_bn(pg, 96, 96, 3, 1)],
        "bp": make_conv_bn(pg, cin, pool_ch, 1, 0),
    }


def make_inception_b(pg, cin):
    return {
        "b3": make_conv_bn(pg, cin, 384, 3, 1, stride=2),
        "b3d": [make_conv_bn(pg, cin, 64, 1, 0),
                make_conv_bn(pg, 64, 96, 3, 1),
                make_conv_bn(pg, 96, 96, 3, 1, stride=2)],
    }


def make_inception_c(pg, cin, c7):
    return {
        "b1": make_conv_bn(pg, cin, 192, 1, 0),
        "b7": [make_conv_bn(pg, cin, c7, 1, 0),
               make_conv_bn(pg, c7, c7, (1, 7), (0, 3)),
               make_conv_bn(pg, c7, 192, (7, 1), (3, 0))],
        "b7d": [make_conv_bn(pg, cin, c7, 1, 0),
                make_conv_bn(pg, c7, c7, (7, 1), (3, 0)),
                make_conv_bn(pg, c7, c7, (1, 7), (0, 3)),
                make_conv_bn(pg, c7, c7, (7, 1), (3, 0)),
                make_conv_bn(pg, c7, 192, (1, 7), (0, 3))],
        "bp": make_conv_bn(pg, cin, 192, 1, 0),
    }


def make_inception_d(pg, cin):
    return {
        "b3": [make_conv_bn(pg, cin, 192, 1, 0),
               make_conv_bn(pg, 192, 320, 3, 1, stride=2)],
        "b7x3": [make_conv_bn(pg, cin, 192, 1, 0),
                 make_conv_bn(pg, 192, 192, (1, 7), (0, 3)),
                 make_conv_bn(pg, 192, 192, (7, 1), (3, 0)),
                 make_conv_bn(pg, 192, 192, 3, 1, stride=2)],
    }


def make_inception_e(pg, cin):
    return {
        "b1": make_conv_bn(pg, cin, 320, 1, 0),
        "b3_1": make_conv_bn(pg, cin, 384, 1, 0),
        "b3_2a": make_conv_bn(pg, 384, 384, (1, 3), (0, 1)),
        "b3_2b": make_conv_bn(pg, 384, 384, (3, 1), (1, 0)),
        "b3d_1": [make_conv_bn(pg, cin, 448, 1, 0),
                  make_conv_bn(pg, 448, 384, 3, 1)],
        "b3d_2a": make_conv_bn(pg, 384, 384, (1, 3), (0, 1)),
        "b3d_2b": make_conv_bn(pg, 384, 384, (3, 1), (1, 0)),
        "bp": make_conv_bn(pg, cin, 192, 1, 0),
    }


_MIX_KINDS = ("A", "A", "A", "B", "C", "C", "C", "C", "D", "E", "E")


def make_googlenet_v3(seed, channels_in, num_classes=101):
    pg = ParamGen(seed)
    params = {
        "in_block": [
            make_conv_bn(pg, channels_in, 32, 3, 1, stride=2),
            make_conv_bn(pg, 32, 32, 3, 1),
            make_conv_bn(pg, 32, 64, 3, 1),
            make_conv_bn(pg, 64, 80, 1, 0),
            make_conv_bn(pg, 80, 192, 3, 1),
        ],
        "mix": [
            make_inception_a(pg, 192, 32),
            make_inception_a(pg, 256, 64),
            make_inception_a(pg, 288, 64),
            make_inception_b(pg, 288),
            make_inception_c(pg, 768, 128),
            make_inception_c(pg, 768, 160),
            make_inception_c(pg, 768, 160),
            make_inception_c(pg, 768, 192),
            make_inception_d(pg, 768),
            make_inception_e(pg, 1280),
            make_inception_e(pg, 2048),
        ],
        "out_conv": make_conv_bn(pg, 2048, 1024, 1, 0),
    }
    k1, k2 = jax.random.split(pg.key())
    fc_w = jax.random.normal(k1, (num_classes, 1024), jnp.float32) / math.sqrt(1024.0)
    fc_b = 0.01 * jax.random.normal(k2, (num_classes,), jnp.float32)
    nc_pad = _round_up(num_classes, 128)                   # lane-dense FC output
    params["fc_w"] = jnp.pad(fc_w.T, ((0, 0), (0, nc_pad - num_classes))
                             ).astype(jnp.bfloat16)        # (1024, nc_pad)
    params["fc_b"] = jnp.pad(fc_b, (0, nc_pad - num_classes),
                             constant_values=-1e30).reshape(1, nc_pad)
    params["num_classes"] = num_classes
    return params


# ------------------------------- forward pass ---------------------------------

def _apply_seq(ps, x):
    for p in ps:
        x = conv_bn_lrelu(x, p)
    return x


def apply_inception_a(p, x):
    b1, b5_in, b3d_in = conv1x1_fused_lrelu(x, [p["b1"], p["b5"][0], p["b3d"][0]])
    b5 = conv_bn_lrelu(b5_in, p["b5"][1])
    b3d = _apply_seq(p["b3d"][1:], b3d_in)
    bp = conv_bn_lrelu(pool2d(x, "avg", 1), p["bp"])
    return jnp.concatenate([b1, b5, b3d, bp], axis=-1)


def apply_inception_b(p, x):
    b3 = conv_bn_lrelu(x, p["b3"])
    b3d = _apply_seq(p["b3d"], x)
    bp = pool2d(x, "max", 2)
    return jnp.concatenate([b3, b3d, bp], axis=-1)


def _scaled_w(eff):
    # AvgPool2d(3,1,1) at 1x1 spatial (count_include_pad) is x/9; fold the 1/9
    # into the following 1x1 conv weight so the branch joins the fused matmul.
    w, b = eff
    return (w.astype(jnp.float32) * (1.0 / 9.0)).astype(jnp.bfloat16), b


def _apply_inception_c_1x1(p, x):
    N, _, _, cin = x.shape
    x2 = x.reshape(N, cin)
    f1 = _effective_1x1(p["b1"], 1, 1)
    f7 = _effective_1x1(p["b7"][0], 1, 1)
    f7d = _effective_1x1(p["b7d"][0], 1, 1)
    fbp = _scaled_w(_effective_1x1(p["bp"], 1, 1))
    b1, b7_in, b7d_in, bp = fused_matmul_split(
        x2, [f1[0], f7[0], f7d[0], fbp[0]], [f1[1], f7[1], f7d[1], fbp[1]])
    b7 = chain_matmul_bias_lrelu(b7_in, [_effective_1x1(q, 1, 1) for q in p["b7"][1:]])
    b7d = chain_matmul_bias_lrelu(b7d_in, [_effective_1x1(q, 1, 1) for q in p["b7d"][1:]])
    y = jnp.concatenate([b1, b7, b7d, bp], axis=-1)
    return y.reshape(N, 1, 1, y.shape[-1])


def apply_inception_c(p, x):
    if x.shape[1] == 1 and x.shape[2] == 1:
        return _apply_inception_c_1x1(p, x)
    b1, b7_in, b7d_in = conv1x1_fused_lrelu(x, [p["b1"], p["b7"][0], p["b7d"][0]])
    b7 = _apply_seq(p["b7"][1:], b7_in)
    b7d = _apply_seq(p["b7d"][1:], b7d_in)
    bp = conv_bn_lrelu(pool2d(x, "avg", 1), p["bp"])
    return jnp.concatenate([b1, b7, b7d, bp], axis=-1)


def _apply_inception_d_1x1(p, x):
    N, _, _, cin = x.shape
    x2 = x.reshape(N, cin)
    f3 = _effective_1x1(p["b3"][0], 1, 1)
    f7 = _effective_1x1(p["b7x3"][0], 1, 1)
    b3_in, b7_in = fused_matmul_split(x2, [f3[0], f7[0]], [f3[1], f7[1]])
    w3b, b3b = _effective_1x1(p["b3"][1], 1, 1)
    b3 = matmul_bias_lrelu(b3_in, w3b, b3b)
    b7 = chain_matmul_bias_lrelu(b7_in, [_effective_1x1(q, 1, 1) for q in p["b7x3"][1:]])
    # MaxPool2d(3, stride=2, padding=1) at 1x1 spatial is the identity
    y = jnp.concatenate([b3, b7, x2], axis=-1)
    return y.reshape(N, 1, 1, y.shape[-1])


def apply_inception_d(p, x):
    if x.shape[1] == 1 and x.shape[2] == 1:
        return _apply_inception_d_1x1(p, x)
    b3_in, b7_in = conv1x1_fused_lrelu(x, [p["b3"][0], p["b7x3"][0]])
    b3 = conv_bn_lrelu(b3_in, p["b3"][1])
    b7 = _apply_seq(p["b7x3"][1:], b7_in)
    bp = pool2d(x, "max", 2)
    return jnp.concatenate([b3, b7, bp], axis=-1)


def _apply_inception_e_1x1(p, x):
    N, _, _, cin = x.shape
    x2 = x.reshape(N, cin)
    f1 = _effective_1x1(p["b1"], 1, 1)
    f31 = _effective_1x1(p["b3_1"], 1, 1)
    f3d1 = _effective_1x1(p["b3d_1"][0], 1, 1)
    fbp = _scaled_w(_effective_1x1(p["bp"], 1, 1))
    b1, b3_in, b3d_in, bp = fused_matmul_split(
        x2, [f1[0], f31[0], f3d1[0], fbp[0]], [f1[1], f31[1], f3d1[1], fbp[1]])
    # paired (1,3)/(3,1) convs -> one wide matmul (columns ordered [2a | 2b])
    w2a, b2a = _effective_1x1(p["b3_2a"], 1, 1)
    w2b, b2b = _effective_1x1(p["b3_2b"], 1, 1)
    b3 = matmul_bias_lrelu(b3_in, jnp.concatenate([w2a, w2b], axis=1),
                           jnp.concatenate([b2a, b2b], axis=1))
    wd2a, bd2a = _effective_1x1(p["b3d_2a"], 1, 1)
    wd2b, bd2b = _effective_1x1(p["b3d_2b"], 1, 1)
    b3d = chain_matmul_bias_lrelu(
        b3d_in,
        [_effective_1x1(p["b3d_1"][1], 1, 1),
         (jnp.concatenate([wd2a, wd2b], axis=1),
          jnp.concatenate([bd2a, bd2b], axis=1))])
    y = jnp.concatenate([b1, b3, b3d, bp], axis=-1)
    return y.reshape(N, 1, 1, y.shape[-1])


def apply_inception_e(p, x):
    if x.shape[1] == 1 and x.shape[2] == 1:
        return _apply_inception_e_1x1(p, x)
    b1, b3_in, b3d_in = conv1x1_fused_lrelu(x, [p["b1"], p["b3_1"], p["b3d_1"][0]])
    b3 = jnp.concatenate([conv_bn_lrelu(b3_in, p["b3_2a"]),
                          conv_bn_lrelu(b3_in, p["b3_2b"])], axis=-1)
    b3d = conv_bn_lrelu(b3d_in, p["b3d_1"][1])
    b3d = jnp.concatenate([conv_bn_lrelu(b3d, p["b3d_2a"]),
                           conv_bn_lrelu(b3d, p["b3d_2b"])], axis=-1)
    bp = conv_bn_lrelu(pool2d(x, "avg", 1), p["bp"])
    return jnp.concatenate([b1, b3, b3d, bp], axis=-1)


_APPLY = {"A": apply_inception_a, "B": apply_inception_b, "C": apply_inception_c,
          "D": apply_inception_d, "E": apply_inception_e}


def googlenet_v3_forward(params, x_nchw):
    # NCHW -> NHWC, bf16 activations (MXU operands), f32 epilogues in-kernel.
    x = jnp.transpose(x_nchw, (0, 2, 3, 1)).astype(jnp.bfloat16)
    ib = params["in_block"]
    x = conv_bn_lrelu(x, ib[0])
    x = conv_bn_lrelu(x, ib[1])
    x = conv_bn_lrelu(x, ib[2])
    x = pool2d(x, "max", 2)
    x = conv_bn_lrelu(x, ib[3])
    x = conv_bn_lrelu(x, ib[4])
    x = pool2d(x, "max", 2)
    for kind, p in zip(_MIX_KINDS, params["mix"]):
        x = _APPLY[kind](p, x)
    # out_block (1x1 conv + AdaptiveAvgPool) + Linear + LogSoftmax, fused head
    return head_logsoftmax(x, params["out_conv"], params["fc_w"],
                           params["fc_b"], params["num_classes"])


# ----------------------------------- main --------------------------------------

if __name__ == "__main__":
    N, C, H, W = 2, 3, 16, 16                  # NCHW, matches PyTorch conv input
    x = jax.random.normal(jax.random.PRNGKey(0), (N, C, H, W), jnp.float32)
    params = make_googlenet_v3(seed=1, channels_in=C)
    out = googlenet_v3_forward(params, x)
    out = jax.block_until_ready(out)
    assert out.shape == (N, 101), out.shape
    assert bool(jnp.all(jnp.isfinite(out)))
    # log-softmax rows must exponentiate-sum to ~1
    assert bool(jnp.allclose(jnp.sum(jnp.exp(out), axis=1), 1.0, atol=1e-4))
    print("KERNEL_OK")
</pallas_src>

<mosaic_0001>
module attributes {stable_mosaic.version = 11 : i64} {
  func.func @_mm_bias_lrelu_kernel(%arg0: i32, %arg1: i32, %arg2: memref<64x27xbf16, #tpu.memory_space<vmem>>, %arg3: memref<27x32xbf16, #tpu.memory_space<vmem>>, %arg4: memref<1x32xf32, #tpu.memory_space<vmem>>, %arg5: memref<64x32xbf16, #tpu.memory_space<vmem>>) attributes {dimension_semantics = [#tpu.dimension_semantics<parallel>, #tpu.dimension_semantics<parallel>], iteration_bounds = array<i64: 2, 1>, scalar_prefetch = 0 : i64, scratch_operands = 0 : i64, tpu.core_type = #tpu.core_type<tc>, window_params = [{transform_indices = @transform_0, window_bounds = array<i64: 64, 27>}, {transform_indices = @transform_1, window_bounds = array<i64: 27, 32>}, {transform_indices = @transform_2, window_bounds = array<i64: 1, 32>}, {transform_indices = @transform_3, window_bounds = array<i64: 64, 32>}]} {
    %c0 = arith.constant 0 : index
    %c0_0 = arith.constant 0 : index
    %0 = vector.load %arg2[%c0, %c0_0] : memref<64x27xbf16, #tpu.memory_space<vmem>>, vector<64x27xbf16>
    %c0_1 = arith.constant 0 : index
    %c0_2 = arith.constant 0 : index
    %1 = vector.load %arg3[%c0_1, %c0_2] : memref<27x32xbf16, #tpu.memory_space<vmem>>, vector<27x32xbf16>
    %cst = arith.constant dense<0.000000e+00> : vector<64x32xf32>
    %2 = tpu.matmul %0, %1, %cst {dimension_numbers = #tpu.dot_dimension_numbers<[1], [0], [0], [1], [0, 0, 1, 1], [], []>} : vector<64x27xbf16>, vector<27x32xbf16>, vector<64x32xf32> -> vector<64x32xf32>
    %c0_3 = arith.constant 0 : index
    %c0_4 = arith.constant 0 : index
    %3 = vector.load %arg4[%c0_3, %c0_4] : memref<1x32xf32, #tpu.memory_space<vmem>>, vector<1x32xf32>
    %4 = vector.broadcast %3 : vector<1x32xf32> to vector<64x32xf32>
    %5 = arith.addf %2, %4 : vector<64x32xf32>
    %cst_5 = arith.constant 0.000000e+00 : f32
    %6 = vector.broadcast %cst_5 : f32 to vector<64x32xf32>
    %7 = arith.cmpf oge, %5, %6 : vector<64x32xf32>
    %cst_6 = arith.constant 2.000000e-01 : f32
    %8 = vector.broadcast %cst_6 : f32 to vector<64x32xf32>
    %9 = arith.mulf %8, %5 : vector<64x32xf32>
    %10 = arith.select %7, %5, %9 : vector<64x32xi1>, vector<64x32xf32>
    %11 = arith.truncf %10 : vector<64x32xf32> to vector<64x32xbf16>
    %c0_7 = arith.constant 0 : index
    %c0_8 = arith.constant 0 : index
    %12 = vector.load %arg5[%c0_7, %c0_8] : memref<64x32xbf16, #tpu.memory_space<vmem>>, vector<64x32xbf16>
    tpu.vector_store %arg5[%c0_7, %c0_8], %11 {strides = array<i32>} : memref<64x32xbf16, #tpu.memory_space<vmem>>, vector<64x32xbf16>,
    return
  }
  func.func @transform_0(%arg0: i32, %arg1: i32) -> (i32, i32) {
    %c0_i32 = arith.constant 0 : i32
    %c0_i32_0 = arith.constant 0 : i32
    return %arg0, %c0_i32 : i32, i32
  }
  func.func @transform_1(%arg0: i32, %arg1: i32) -> (i32, i32) {
    %c0_i32 = arith.constant 0 : i32
    %c0_i32_0 = arith.constant 0 : i32
    return %c0_i32, %arg1 : i32, i32
  }
  func.func @transform_2(%arg0: i32, %arg1: i32) -> (i32, i32) {
    %c0_i32 = arith.constant 0 : i32
    %c0_i32_0 = arith.constant 0 : i32
    return %c0_i32, %arg1 : i32, i32
  }
  func.func @transform_3(%arg0: i32, %arg1: i32) -> (i32, i32) {
    %c0_i32 = arith.constant 0 : i32
    return %arg0, %arg1 : i32, i32
  }
}

</mosaic_0001>

<llo_original>
// kernel: tpu_custom_call.1
$region0: #{tpu_custom_call.1}
  #allocation0 [shape = 'u32[]', space=smem, size = 0x4, offset = 0x4, fixed_abs, tag = 'smem constant byte address 0x4 - core index']
  #allocation1 [shape = 'u32[72,128]{1,0:T(1,128)}', space=vmem, size = 0x9000, scoped, tag = 'internal scratch']
  %s0 = inlined_call_operand.vmem [shape: bf16[128,27], index: 0, kind: input, shape index: {}]
  %s1 = inlined_call_operand.vmem [shape: bf16[27,32], index: 1, kind: input, shape index: {}]
  %s2 = inlined_call_operand.vmem [shape: f32[1,32], index: 2, kind: input, shape index: {}]
  %s3 = inlined_call_operand.vmem [shape: bf16[128,32], index: 3, kind: output, shape index: {}]
  %s4 = sld [smem:[#allocation0]]
  $region45: #{tpu_custom_call.1} parent=0
    _
  %s6 = ssub.s32 1, %s4
  %s7 = scalar_select 0, %s6, %s4
  loop: start=0, step=1, limit=4
  $region2: #{tpu_custom_call.1} parent=0 // loop_pre_header
    _
  $region3: #{tpu_custom_call.1} parent=0 // loop_header
    %s9 = sphi 0, %s13
    %p10 = scmp.ge.s32.totalorder %s9, 4
    %s16 = sphi 0, %s28
    %s17 = sphi 0, %s24
    %s18 = sphi 0, %s16
    %s19 = sphi 0, %s17
    %s20 = sphi 0, %s18
    %s21 = sphi 0, %s19
    %s31 = sphi 0, %s33
    %s34 = sphi 0, %s31
    %s35 = sphi 0, %s34
    %s51 = sphi 0, %s35
    %s57 = sphi 0, %s59
    %s60 = sphi 0, %s57
    %s61 = sphi 0, %s60
    %s77 = sphi 0, %s61
    %s83 = sphi 0, %s85
    %s86 = sphi 0, %s83
    %s87 = sphi 0, %s86
    %s103 = sphi 0, %s87
    %s111 = sphi 0, %s113
    %s114 = sphi 0, %s111
    %s115 = sphi 0, %s114
    %s131 = sphi 0, %s115
  $region4: #{tpu_custom_call.1} parent=0 // loop_header_branch
    %12 = sbr.rel (%p10) target = $region8
  $region5: #{tpu_custom_call.1} parent=0 // loop_body
    %s14 = ssub.s32 %s9, 1
    %s15 = ssub.s32 %s9, 2
    %s22 = sadd.s32 1, %s17
    %p23 = scmp.ge.s32.totalorder %s22, 1
    %s24 = scalar_select %p23, 0, %s22
    %s25 = sadd.s32 1, %s16
    %s26 = scalar_select %p23, %s25, %s16
    %p27 = scmp.ge.s32.totalorder %s26, 2
    %s28 = scalar_select %p27, 0, %s26
    %s29 = ssub.s32 %s16, %s28
    %p30 = scmp.eq.s32.totalorder %s29, 0
    %s32 = sadd.s32 %s31, 1
    %s33 = scalar_select %p30, %s31, %s32
    %p36 = pneg %p30
    %p37 = scmp.eq.s32.totalorder %s9, 1
    %p38 = por %p36, %p37
    %p39 = scmp.ne.s32.totalorder %s31, %s34
    %p40 = scmp.eq.s32.totalorder %s9, 0
    %p41 = por %p39, %p40
    %p42 = scmp.ne.s32.totalorder %s31, %s34
    %p43 = scmp.eq.s32.totalorder %s14, 1
    %p44 = por %p42, %p43
    %p45 = scmp.ne.s32.totalorder %s34, %s35
    %p46 = scmp.eq.s32.totalorder %s14, 0
    %p47 = por %p45, %p46
    %p48 = scmp.ne.s32.totalorder %s34, %s35
    %p49 = scmp.eq.s32.totalorder %s15, 1
    %p50 = por %p48, %p49
    %p52 = scmp.ne.s32.totalorder %s35, %s51
    %p53 = scmp.eq.s32.totalorder %s15, 0
    %p54 = por %p52, %p53
    %s55 = ssub.s32 %s17, %s24
    %p56 = scmp.eq.s32.totalorder %s55, 0
    %s58 = sadd.s32 %s57, 1
    %s59 = scalar_select %p56, %s57, %s58
    %p62 = pneg %p56
    %p63 = scmp.eq.s32.totalorder %s9, 1
    %p64 = por %p62, %p63
    %p65 = scmp.ne.s32.totalorder %s57, %s60
    %p66 = scmp.eq.s32.totalorder %s9, 0
    %p67 = por %p65, %p66
    %p68 = scmp.ne.s32.totalorder %s57, %s60
    %p69 = scmp.eq.s32.totalorder %s14, 1
    %p70 = por %p68, %p69
    %p71 = scmp.ne.s32.totalorder %s60, %s61
    %p72 = scmp.eq.s32.totalorder %s14, 0
    %p73 = por %p71, %p72
    %p74 = scmp.ne.s32.totalorder %s60, %s61
    %p75 = scmp.eq.s32.totalorder %s15, 1
    %p76 = por %p74, %p75
    %p78 = scmp.ne.s32.totalorder %s61, %s77
    %p79 = scmp.eq.s32.totalorder %s15, 0
    %p80 = por %p78, %p79
    %s81 = ssub.s32 %s17, %s24
    %p82 = scmp.eq.s32.totalorder %s81, 0
    %s84 = sadd.s32 %s83, 1
    %s85 = scalar_select %p82, %s83, %s84
    %p88 = pneg %p82
    %p89 = scmp.eq.s32.totalorder %s9, 1
    %p90 = por %p88, %p89
    %p91 = scmp.ne.s32.totalorder %s83, %s86
    %p92 = scmp.eq.s32.totalorder %s9, 0
    %p93 = por %p91, %p92
    %p94 = scmp.ne.s32.totalorder %s83, %s86
    %p95 = scmp.eq.s32.totalorder %s14, 1
    %p96 = por %p94, %p95
    %p97 = scmp.ne.s32.totalorder %s86, %s87
    %p98 = scmp.eq.s32.totalorder %s14, 0
    %p99 = por %p97, %p98
    %p100 = scmp.ne.s32.totalorder %s86, %s87
    %p101 = scmp.eq.s32.totalorder %s15, 1
    %p102 = por %p100, %p101
    %p104 = scmp.ne.s32.totalorder %s87, %s103
    %p105 = scmp.eq.s32.totalorder %s15, 0
    %p106 = por %p104, %p105
    %s107 = ssub.s32 %s16, %s28
    %s108 = ssub.s32 %s17, %s24
    %s109 = sor.u32 %s107, %s108
    %p110 = scmp.eq.s32.totalorder %s109, 0
    %s112 = sadd.s32 %s111, 1
    %s113 = scalar_select %p110, %s111, %s112
    %p116 = pneg %p110
    %p117 = scmp.eq.s32.totalorder %s9, 1
    %p118 = por %p116, %p117
    %p119 = scmp.ne.s32.totalorder %s111, %s114
    %p120 = scmp.eq.s32.totalorder %s9, 0
    %p121 = por %p119, %p120
    %p122 = scmp.ne.s32.totalorder %s111, %s114
    %p123 = scmp.eq.s32.totalorder %s14, 1
    %p124 = por %p122, %p123
    %p125 = scmp.ne.s32.totalorder %s114, %s115
    %p126 = scmp.eq.s32.totalorder %s14, 0
    %p127 = por %p125, %p126
    %p128 = scmp.ne.s32.totalorder %s114, %s115
    %p129 = scmp.eq.s32.totalorder %s15, 1
    %p130 = por %p128, %p129
    %p132 = scmp.ne.s32.totalorder %s115, %s131
    %p133 = scmp.eq.s32.totalorder %s15, 0
    %p134 = por %p132, %p133
    %p135 = scmp.le.s32.totalorder 1, %s9
    %p136 = scmp.lt.s32.totalorder %s9, 3
    %p137 = pnand %p135, %p136
    %p138 = pneg %p137
    // Predicated region
    $region9: #{tpu_custom_call.1} parent=5 // pred_check
      _
    $region10: #{tpu_custom_call.1} parent=5 // pred_check_branch
      %140 = sbr.rel (%p137) target = $region12
    $region11: #{tpu_custom_call.1} parent=5 // pred_region
      %s141 = ssub.s32 %s9, 1
      // Predicated region
      $region13: #{tpu_custom_call.1} parent=11 // pred_check
        %p142 = pneg %p73
      $region14: #{tpu_custom_call.1} parent=11 // pred_check_branch
        %144 = sbr.rel (%p142) target = $region16
      $region15: #{tpu_custom_call.1} parent=11 // pred_region
        %p145 = scmp.lt.s32.totalorder %s19, 0
        %s146 = scalar_select %p145, %s19, 0
        %s147 = smul.addr %s146, 4
        %s148 = scalar_lea.vmem %s1, %s147
      $region16: #{tpu_custom_call.1} parent=11 // pred_fallthru
        _
      // Predicated region
      $region17: #{tpu_custom_call.1} parent=11 // pred_check
        %p149 = pneg %p99
      $region18: #{tpu_custom_call.1} parent=11 // pred_check_branch
        %151 = sbr.rel (%p149) target = $region20
      $region19: #{tpu_custom_call.1} parent=11 // pred_region
        %p152 = scmp.lt.s32.totalorder %s19, 0
        %s153 = scalar_select %p152, %s19, 0
        %s154 = scalar_lea.vmem %s2, %s153
      $region20: #{tpu_custom_call.1} parent=11 // pred_fallthru
        _
    $region12: #{tpu_custom_call.1} parent=5 // pred_fallthru
      _
    %p155 = scmp.lt.s32.totalorder %s9, 2
    // Predicated region
    $region21: #{tpu_custom_call.1} parent=5 // pred_check
      %p156 = pneg %p155
    $region22: #{tpu_custom_call.1} parent=5 // pred_check_branch
      %158 = sbr.rel (%p156) target = $region24
    $region23: #{tpu_custom_call.1} parent=5 // pred_region
      // Predicated region
      $region25: #{tpu_custom_call.1} parent=23 // pred_check
        %p159 = pneg %p41
      $region26: #{tpu_custom_call.1} parent=23 // pred_check_branch
        %161 = sbr.rel (%p159) target = $region28
      $region27: #{tpu_custom_call.1} parent=23 // pred_region
        %s162 = smul.u32 8, %s16
        %p163 = scmp.lt.s32.totalorder %s162, 15
        %s164 = scalar_select %p163, %s162, 15
        %s165 = smul.addr %s164, 4
        %s166 = scalar_lea.vmem %s0, %s165
        %s167 = smul.u32 8, %s16
      $region28: #{tpu_custom_call.1} parent=23 // pred_fallthru
        _
    $region24: #{tpu_custom_call.1} parent=5 // pred_fallthru
      _
    %p168 = scmp.le.s32.totalorder 1, %s9
    %p169 = scmp.lt.s32.totalorder %s9, 3
    %p170 = pnand %p168, %p169
    %p171 = pneg %p170
    // Predicated region
    $region29: #{tpu_custom_call.1} parent=5 // pred_check
      _
    $region30: #{tpu_custom_call.1} parent=5 // pred_check_branch
      %173 = sbr.rel (%p170) target = $region32
    $region31: #{tpu_custom_call.1} parent=5 // pred_region
      %s174 = ssub.s32 %s9, 1
      %s175 = smul.u32 8, %s18
      %p176 = scmp.lt.s32.totalorder %s175, 15
      %s177 = scalar_select %p176, %s175, 15
      %s178 = smul.addr %s177, 4
      %s179 = scalar_lea.vmem %s0, %s178
      %p180 = pneg %p47
      %p181 = pneg %p44
      %p182 = scmp.lt.s32.totalorder %s19, 0
      %s183 = scalar_select %p182, %s19, 0
      %s184 = smul.addr %s183, 4
      %s185 = scalar_lea.vmem %s1, %s184
      %p186 = pneg %p73
      %p187 = pneg %p70
      %p188 = scmp.lt.s32.totalorder %s19, 0
      %s189 = scalar_select %p188, %s19, 0
      %s190 = scalar_lea.vmem %s2, %s189
      %p191 = pneg %p99
      %p192 = pneg %p96
      %p193 = pneg %p127
      %p194 = pneg %p124
      %s195 = smul.u32 8, %s18
      %p196 = scmp.lt.s32.totalorder %s195, 15
      %s197 = scalar_select %p196, %s195, 15
      %p198 = scmp.lt.s32.totalorder %s19, 0
      %s199 = scalar_select %p198, %s19, 0
      %s200 = sadd.s32 %s199, %s197
      %s201 = smul.addr %s200, 4
      %s202 = scalar_lea.vmem %s3, %s201
      %s203 = smul.u32 8, %s18
      %p204 = scmp.lt.s32.totalorder %s203, 15
      %s205 = scalar_select %p204, %s203, 15
      %s206 = smul.addr %s205, 4
      %s207 = scalar_lea.vmem %s0, %s206
      %s208 = smul.u32 8, %s18
      %p209 = scmp.lt.s32.totalorder %s19, 0
      %s210 = scalar_select %p209, %s19, 0
      %s211 = smul.addr %s210, 4
      %s212 = scalar_lea.vmem %s1, %s211
      %p213 = scmp.lt.s32.totalorder %s19, 0
      %s214 = scalar_select %p213, %s19, 0
      %s215 = scalar_lea.vmem %s2, %s214
      %s216 = smul.u32 8, %s18
      %p217 = scmp.lt.s32.totalorder %s216, 15
      %s218 = scalar_select %p217, %s216, 15
      %p219 = scmp.lt.s32.totalorder %s19, 0
      %s220 = scalar_select %p219, %s19, 0
      %s221 = sadd.s32 %s220, %s218
      %s222 = smul.addr %s221, 4
      %s223 = scalar_lea.vmem %s3, %s222
      %s224 = smul.u32 8, %s18
      %v226 = vld [vmem:[%s207] sm:$0xf]
      %v227 = vld [vmem:[%s207 + $0x4] sm:$0xf]
      %v228 = vld [vmem:[%s207 + $0x8] sm:$0xf]
      %v229 = vld [vmem:[%s207 + $0xc] sm:$0xf]
      %v230 = vld [vmem:[%s207 + $0x10] sm:$0xf]
      %v231 = vld [vmem:[%s207 + $0x14] sm:$0xf]
      %v232 = vld [vmem:[%s207 + $0x18] sm:$0xf]
      %v233 = vld [vmem:[%s207 + $0x1c] sm:$0xf]
      %v234 = vld [vmem:[%s212] sm:$0xf]
      %v235 = vld [vmem:[%s212 + $0x4] sm:$0xf]
      %v236 = vld [vmem:[%s212 + $0x8] sm:$0xf]
      %v237 = vld [vmem:[%s212 + $0xc] sm:$0x3]
      %v238 = vld [vmem:[%s215] sm:$0x1]
      %v240 = vperm.slane %v238, 0
      %v250 = vunpack.c.l.b16 %v226
      %v251 = vunpack.c.l.b16 %v227
      %v252 = vunpack.c.l.b16 %v228
      %v253 = vunpack.c.l.b16 %v229
      %v254 = vunpack.c.l.b16 %v230
      %v255 = vunpack.c.l.b16 %v231
      %v256 = vunpack.c.l.b16 %v232
      %v257 = vunpack.c.l.b16 %v233
      %v258 = vpack.c.b16 %v251, %v250
      %v259 = vpack.c.b16 %v253, %v252
      %v260 = vpack.c.b16 %v255, %v254
      %v261 = vpack.c.b16 %v257, %v256
      %v266 = vunpack.c.l.b16 %v234
      %v267 = vunpack.c.l.b16 %v235
      %v268 = vunpack.c.l.b16 %v236
      %v269 = vunpack.c.l.b16 %v237
      %v270 = vpack.c.b16 %v267, %v266
      %v271 = vpack.c.b16 %v269, %v268
      %vm273 = vcmask 220160
      %v275 = vsel %vm273, %v258, 0
      %v278 = vsel %vm273, %v259, 0
      %v281 = vsel %vm273, %v260, 0
      %v284 = vsel %vm273, %v261, 0
      %vm286 = vcmask 1044480
      %vm287 = vcmask 1045504
      %v288 = vsel %vm286, 4294967295, 65535
      %v289 = vsel %vm287, %v288, 0
      %v291 = vand.u32 %v271, %v289
      %293 = vmatpush.bf16.msra.mxu0 0
      %294 = vmatpush.bf16.msra.mxu0 0
      %295 = vmatpush.bf16.msra.mxu0 0
      %296 = vmatpush.bf16.msra.mxu0 0
      %297 = vmatpush.bf16.msra.mxu0 0
      %298 = vmatpush.bf16.msra.mxu0 0
      %299 = vmatpush.bf16.msra.mxu0 %v291
      %300 = vmatpush.bf16.msra.mxu0 %v270
      %301 = vmatmul.bf16.gmra.mxu0 %v275
      %v302 = vpop.f32.mrf.mxu0
      %v303 = vadd.f32 %v240, %v302
      %v304 = vpop.f32.mrf.mxu0
      %v305 = vadd.f32 %v240, %v304
      %306 = vmatmul.bf16.gmra.mxu0 %v278
      %v307 = vpop.f32.mrf.mxu0
      %v308 = vadd.f32 %v240, %v307
      %v309 = vpop.f32.mrf.mxu0
      %v310 = vadd.f32 %v240, %v309
      %311 = vmatmul.bf16.gmra.mxu0 %v281
      %v312 = vpop.f32.mrf.mxu0
      %v313 = vadd.f32 %v240, %v312
      %v314 = vpop.f32.mrf.mxu0
      %v315 = vadd.f32 %v240, %v314
      %316 = vmatmul.bf16.gmra.mxu0 %v284
      %v317 = vpop.f32.mrf.mxu0
      %v318 = vadd.f32 %v240, %v317
      %v319 = vpop.f32.mrf.mxu0
      %v320 = vadd.f32 %v240, %v319
      %321 = vdwg.mxu0
      %vm322 = vcmp.ge.f32.partialorder %v303, 0.0
      %vm323 = vcmp.ge.f32.partialorder %v305, 0.0
      %vm324 = vcmp.ge.f32.partialorder %v308, 0.0
      %vm325 = vcmp.ge.f32.partialorder %v310, 0.0
      %vm326 = vcmp.ge.f32.partialorder %v313, 0.0
      %vm327 = vcmp.ge.f32.partialorder %v315, 0.0
      %vm328 = vcmp.ge.f32.partialorder %v318, 0.0
      %vm329 = vcmp.ge.f32.partialorder %v320, 0.0
      %v330 = vmul.f32 %v303, 0.2
      %v331 = vmul.f32 %v305, 0.2
      %v332 = vmul.f32 %v308, 0.2
      %v333 = vmul.f32 %v310, 0.2
      %v334 = vmul.f32 %v313, 0.2
      %v335 = vmul.f32 %v315, 0.2
      %v336 = vmul.f32 %v318, 0.2
      %v337 = vmul.f32 %v320, 0.2
      %v338 = vsel %vm322, %v303, %v330
      %v339 = vsel %vm323, %v305, %v331
      %v340 = vsel %vm324, %v308, %v332
      %v341 = vsel %vm325, %v310, %v333
      %v342 = vsel %vm326, %v313, %v334
      %v343 = vsel %vm327, %v315, %v335
      %v344 = vsel %vm328, %v318, %v336
      %v345 = vsel %vm329, %v320, %v337
      %v346 = vpack.c.bf16 %v338, %v338
      %v347 = vpack.c.bf16 %v339, %v339
      %v348 = vpack.c.bf16 %v340, %v340
      %v349 = vpack.c.bf16 %v341, %v341
      %v350 = vpack.c.bf16 %v342, %v342
      %v351 = vpack.c.bf16 %v343, %v343
      %v352 = vpack.c.bf16 %v344, %v344
      %v353 = vpack.c.bf16 %v345, %v345
      %vm354 = vcmask 257024
      %355 = vst.msk [vmem:[%s223] sm:$0xf] %vm354, %v346
      %356 = vst.msk [vmem:[%s223 + $0x4] sm:$0xf] %vm354, %v347
      %357 = vst.msk [vmem:[%s223 + $0x8] sm:$0xf] %vm354, %v348
      %358 = vst.msk [vmem:[%s223 + $0xc] sm:$0xf] %vm354, %v349
      %359 = vst.msk [vmem:[%s223 + $0x10] sm:$0xf] %vm354, %v350
      %360 = vst.msk [vmem:[%s223 + $0x14] sm:$0xf] %vm354, %v351
      %361 = vst.msk [vmem:[%s223 + $0x18] sm:$0xf] %vm354, %v352
      %362 = vst.msk [vmem:[%s223 + $0x1c] sm:$0xf] %vm354, %v353
      %s363 = smul.u32 8, %s18
      %p364 = scmp.lt.s32.totalorder %s363, 15
      %s365 = scalar_select %p364, %s363, 15
      %p366 = scmp.lt.s32.totalorder %s19, 0
      %s367 = scalar_select %p366, %s19, 0
      %s368 = sadd.s32 %s367, %s365
      %s369 = smul.addr %s368, 4
      %s370 = scalar_lea.vmem %s3, %s369
      // Predicated region
      $region33: #{tpu_custom_call.1} parent=31 // pred_check
        %p371 = pneg %p124
      $region34: #{tpu_custom_call.1} parent=31 // pred_check_branch
        %373 = sbr.rel (%p371) target = $region36
      $region35: #{tpu_custom_call.1} parent=31 // pred_region
        %s374 = smul.u32 8, %s18
      $region36: #{tpu_custom_call.1} parent=31 // pred_fallthru
        _
    $region32: #{tpu_custom_call.1} parent=5 // pred_fallthru
      _
    %p375 = scmp.le.s32.totalorder 2, %s9
    // Predicated region
    $region37: #{tpu_custom_call.1} parent=5 // pred_check
      %p376 = pneg %p375
    $region38: #{tpu_custom_call.1} parent=5 // pred_check_branch
      %378 = sbr.rel (%p376) target = $region40
    $region39: #{tpu_custom_call.1} parent=5 // pred_region
      %s379 = ssub.s32 %s9, 2
      // Predicated region
      $region41: #{tpu_custom_call.1} parent=39 // pred_check
        %p380 = pneg %p130
      $region42: #{tpu_custom_call.1} parent=39 // pred_check_branch
        %382 = sbr.rel (%p380) target = $region44
      $region43: #{tpu_custom_call.1} parent=39 // pred_region
        %s383 = smul.u32 8, %s20
        %p384 = scmp.lt.s32.totalorder %s383, 15
        %s385 = scalar_select %p384, %s383, 15
        %p386 = scmp.lt.s32.totalorder %s21, 0
        %s387 = scalar_select %p386, %s21, 0
        %s388 = sadd.s32 %s387, %s385
        %s389 = smul.addr %s388, 4
        %s390 = scalar_lea.vmem %s3, %s389
      $region44: #{tpu_custom_call.1} parent=39 // pred_fallthru
        _
    $region40: #{tpu_custom_call.1} parent=5 // pred_fallthru
      _
  $region6: #{tpu_custom_call.1} parent=0 // loop_footer
    %s13 = sadd.s32 1, %s9
  $region7: #{tpu_custom_call.1} parent=0 // loop_footer_branch
    %8 = sbr.rel target = $region3
  $region8: #{tpu_custom_call.1} parent=0 // loop_exit
    _

</llo_original>
